<compile_context>
chip_gen: v7x
topology: tpu7x:2x2x1
jax: 0.10.0
libtpu: 0.0.40
codegen_flags: <defaults>
</compile_context>

<pallas_src>
import functools
import numpy as np

import jax
import jax.numpy as jnp
from jax import lax
from jax.experimental import pallas as pl
from jax.experimental.pallas import tpu as pltpu


# Same corner ordering as utils.BOX_OFFSETS in the reference code:
#   [[i, j, k] for i in (0, 1) for j in (0, 1) for k in (0, 1)]  -> corner c = 4i+2j+k
_PRIMES = (1, 2654435761, 805459861)


def _round_up(a, m):
    return (a + m - 1) // m * m


def _hash_kernel(gs_ref, x_ref, idx_ref, *, box_min, box_max, mask):
    """grid = (level, tile). x_ref: (T, 3) f32 -> idx_ref: (T, 8) int32 hashed corners."""
    lvl = pl.program_id(0)
    # Per dimension, the two candidate terms bl*p and (bl+1)*p (mod 2**32); the 8
    # corner hashes are xors of one candidate per dimension (no 8x recompute).
    cand = []
    for d in range(3):
        xd = x_ref[:, d:d + 1]                                    # (T, 1) f32
        gsd = gs_ref[lvl, d]                                      # scalar f32 (SMEM)
        xc = jnp.clip(xd, box_min[d], box_max[d])                 # torch clamps OOB pts
        # TODO(synk): the torch module prints a warning when clamping; no kernel print.
        bl = jnp.floor((xc - box_min[d]) / gsd).astype(jnp.int32).astype(jnp.uint32)
        p = jnp.uint32(_PRIMES[d])
        t0 = bl * p
        cand.append((t0, t0 + p))
    cols = []
    for c in range(8):
        i, j, k = (c >> 2) & 1, (c >> 1) & 1, c & 1
        h = cand[0][i] ^ cand[1][j] ^ cand[2][k]
        cols.append((h & jnp.uint32(mask)).astype(jnp.int32))
    idx_ref[...] = jnp.concatenate(cols, axis=1)                  # (T, 8)


def _gather_kernel(gs_ref, x_ref, idxv_ref, idx_hbm_ref, tbl_ref, out_ref,
                   idx_smem, rows_ref, sem,
                   *, box_min, box_max, n_feat, tile_n, row_shift, lane_mask):
    """grid = (level, tile). Streamed-table gather + trilinear interpolation."""
    lvl = pl.program_id(0)
    tile = pl.program_id(1)

    # (1) Kick off the HBM->SMEM DMA of this tile's 8*T hashed corner indices.
    cp = pltpu.make_async_copy(
        idx_hbm_ref.at[lvl, pl.ds(tile * (tile_n * 8), tile_n * 8)],
        idx_smem, sem.at[0])
    cp.start()

    # (2) Trilinear weights while the DMA is in flight.  NB: torch uses the
    #     *unclamped* x against voxel bounds derived from the clamped x.
    ws = []
    for d in range(3):
        xd = x_ref[:, d:d + 1]                                    # (T, 1)
        gsd = gs_ref[lvl, d]
        xc = jnp.clip(xd, box_min[d], box_max[d])
        vmin = jnp.floor((xc - box_min[d]) / gsd) * gsd + box_min[d]
        vmax = vmin + gsd
        ws.append((xd - vmin) / (vmax - vmin))
    w0, w1, w2 = ws

    # (3) Gather: one dynamic-sublane row load from the VMEM-resident level table per
    #     (point, corner).  Each 128-lane row holds 128/n_feat consecutive entries.
    cp.wait()

    def body(n, carry):
        base = n * 8
        for c in range(8):
            h = idx_smem[base + c]                                # scalar int32
            r = h >> row_shift                                    # row in (rows, 128) view
            rows_ref[c, pl.ds(n, 1), :] = tbl_ref[pl.ds(r, 1), :]
        return carry

    lax.fori_loop(0, tile_n, body, 0)

    # (4) Extract the n_feat features of each corner from its 128-lane row with a
    #     vectorized one-hot select + lane reduction, then lerp (all vectorized).
    lanes = lax.broadcasted_iota(jnp.int32, (1, 128), 1)
    loff = (idxv_ref[...] & lane_mask) * n_feat                   # (T, 8) lane offsets

    def corner(c):
        rc = rows_ref[c]                                          # (T, 128)
        oc = loff[:, c:c + 1]                                     # (T, 1)
        feats = [
            jnp.sum(jnp.where(lanes == oc + f, rc, 0.0), axis=1, keepdims=True)
            for f in range(n_feat)
        ]
        return jnp.concatenate(feats, axis=1)                     # (T, F)

    c00 = corner(0) * (1.0 - w0) + corner(4) * w0
    c01 = corner(1) * (1.0 - w0) + corner(5) * w0
    c10 = corner(2) * (1.0 - w0) + corner(6) * w0
    c11 = corner(3) * (1.0 - w0) + corner(7) * w0
    c0 = c00 * (1.0 - w1) + c10 * w1
    c1 = c01 * (1.0 - w1) + c11 * w1
    out_ref[...] = c0 * (1.0 - w2) + c1 * w2                      # (T, F)


def ingp_hash_encode(x, tables, *, box_min, box_max, log2_table_size,
                     coarsest_resolution=16, finest_resolution=512, tile_n=128):
    n_levels, table_size, n_feat = tables.shape
    n = x.shape[0]
    assert x.shape == (n, 3)
    assert table_size == 2 ** log2_table_size
    assert log2_table_size < 32                 # uint32 hash == torch int64-then-mask
    assert 128 % n_feat == 0 and (table_size * n_feat) % 128 == 0

    entries_per_row = 128 // n_feat
    row_shift = int(np.log2(entries_per_row))
    tbl_rows = (table_size * n_feat) // 128

    # Per-level resolutions / grid sizes (float32, matching the torch math). Glue.
    if n_levels > 1:
        b = np.exp((np.log(np.float32(finest_resolution)) -
                    np.log(np.float32(coarsest_resolution))) /
                   np.float32(n_levels - 1)).astype(np.float32)
    else:
        b = np.float32(1.0)
    resolutions = np.floor(
        np.float32(coarsest_resolution) *
        np.power(b, np.arange(n_levels, dtype=np.float32))).astype(np.float32)
    bmin = np.asarray(box_min, np.float32)
    bmax = np.asarray(box_max, np.float32)
    grid_sizes = ((bmax - bmin)[None, :] / resolutions[:, None]).astype(np.float32)
    gs_arr = jnp.asarray(grid_sizes)
    bmin_t = tuple(float(v) for v in bmin)
    bmax_t = tuple(float(v) for v in bmax)
    mask = (1 << log2_table_size) - 1

    # Tile / pad the point dimension (padded rows are in-box points, sliced off later).
    x = x.astype(jnp.float32)
    tile_n = int(min(tile_n, _round_up(n, 8)))
    n_pad = _round_up(n, tile_n)
    if n_pad != n:
        pad = jnp.broadcast_to(jnp.asarray(bmin, jnp.float32), (n_pad - n, 3))
        x_p = jnp.concatenate([x, pad], axis=0)
    else:
        x_p = x
    n_tiles = n_pad // tile_n

    # --- kernel 1: hashed corner indices ------------------------------------------
    idx = pl.pallas_call(
        functools.partial(_hash_kernel, box_min=bmin_t, box_max=bmax_t, mask=mask),
        out_shape=jax.ShapeDtypeStruct((n_levels, n_pad, 8), jnp.int32),
        grid_spec=pltpu.PrefetchScalarGridSpec(
            num_scalar_prefetch=0,
            grid=(n_levels, n_tiles),
            in_specs=[
                pl.BlockSpec(memory_space=pltpu.MemorySpace.SMEM),    # grid sizes
                pl.BlockSpec((tile_n, 3), lambda l, t: (t, 0)),       # x tile
            ],
            out_specs=pl.BlockSpec((None, tile_n, 8), lambda l, t: (l, t, 0)),
        ),
        compiler_params=pltpu.CompilerParams(
            dimension_semantics=("parallel", "arbitrary")),
    )(gs_arr, x_p)

    # Flat alias (free reshape) used for the in-kernel HBM->SMEM index DMA.
    idx_flat = idx.reshape(n_levels, n_pad * 8)
    # Lane-dense view of the tables: (L, table_size, F) -> (L, table_size*F/128, 128).
    tables_r = tables.reshape(n_levels, tbl_rows, 128)
    table_block_bytes = tbl_rows * 128 * 4
    vmem_limit = int(min(64 << 20, 2 * table_block_bytes + (16 << 20)))

    # --- kernel 2: streamed-table gather + trilinear interpolation -----------------
    out_lnf = pl.pallas_call(
        functools.partial(_gather_kernel, box_min=bmin_t, box_max=bmax_t,
                          n_feat=n_feat, tile_n=tile_n, row_shift=row_shift,
                          lane_mask=entries_per_row - 1),
        out_shape=jax.ShapeDtypeStruct((n_levels, n_pad, n_feat), jnp.float32),
        grid_spec=pltpu.PrefetchScalarGridSpec(
            num_scalar_prefetch=0,
            grid=(n_levels, n_tiles),
            in_specs=[
                pl.BlockSpec(memory_space=pltpu.MemorySpace.SMEM),            # grid sizes
                pl.BlockSpec((tile_n, 3), lambda l, t: (t, 0)),               # x tile
                pl.BlockSpec((None, tile_n, 8), lambda l, t: (l, t, 0)),      # idx (VMEM)
                pl.BlockSpec(memory_space=pl.ANY),                            # idx (HBM)
                pl.BlockSpec((None, tbl_rows, 128), lambda l, t: (l, 0, 0)),  # level table
            ],
            out_specs=pl.BlockSpec((None, tile_n, n_feat), lambda l, t: (l, t, 0)),
            scratch_shapes=[
                pltpu.SMEM((tile_n * 8,), jnp.int32),        # this tile's corner hashes
                pltpu.VMEM((8, tile_n, 128), jnp.float32),   # gathered 128-lane rows
                pltpu.SemaphoreType.DMA((1,)),
            ],
        ),
        compiler_params=pltpu.CompilerParams(
            dimension_semantics=("parallel", "arbitrary"),
            vmem_limit_bytes=vmem_limit),
    )(gs_arr, x_p, idx, idx_flat, tables_r)

    # (L, N_pad, F) -> (N, L*F)  ==  torch.cat(per-level embeddings, dim=-1)
    return jnp.transpose(out_lnf, (1, 0, 2))[:n].reshape(n, n_levels * n_feat)


if __name__ == "__main__":
    key = jax.random.PRNGKey(0)
    k_x, k_tbl = jax.random.split(key)

    n_points = 32
    n_levels = 16
    n_feature_per_level = 2
    log2_table_size = 19
    box_min = (-1.0, -1.0, -1.0)
    box_max = (1.0, 1.0, 1.0)

    # Deterministic inputs / parameters (nn.init.uniform_(w, -1e-4, 1e-4) per level).
    x = jax.random.uniform(k_x, (n_points, 3), jnp.float32, minval=-1.0, maxval=1.0)
    tables = jax.random.uniform(
        k_tbl, (n_levels, 2 ** log2_table_size, n_feature_per_level),
        jnp.float32, minval=-1e-4, maxval=1e-4)

    out = ingp_hash_encode(
        x, tables, box_min=box_min, box_max=box_max,
        log2_table_size=log2_table_size,
        coarsest_resolution=16, finest_resolution=512)
    out = jax.block_until_ready(out)

    assert out.shape == (n_points, n_levels * n_feature_per_level), out.shape
    assert bool(jnp.all(jnp.isfinite(out)))
    print("KERNEL_OK")
</pallas_src>

<mosaic_0001>
module attributes {stable_mosaic.version = 11 : i64} {
  func.func @_hash_kernel(%arg0: i32, %arg1: i32, %arg2: memref<16x3xf32, #tpu.memory_space<smem>>, %arg3: memref<32x3xf32, #tpu.memory_space<vmem>>, %arg4: memref<1x32x8xi32, #tpu.memory_space<vmem>>) attributes {dimension_semantics = [#tpu.dimension_semantics<parallel>, #tpu.dimension_semantics<arbitrary>], iteration_bounds = array<i64: 16, 1>, scalar_prefetch = 0 : i64, scratch_operands = 0 : i64, tpu.core_type = #tpu.core_type<tc>, window_params = [{transform_indices = @transform_0, window_bounds = array<i64: 16, 3>}, {transform_indices = @transform_1, window_bounds = array<i64: 32, 3>}, {transform_indices = @transform_2, window_bounds = array<i64: 1, 32, 8>}]} {
    %c0 = arith.constant 0 : index
    %c0_0 = arith.constant 0 : index
    %0 = vector.load %arg3[%c0, %c0_0] : memref<32x3xf32, #tpu.memory_space<vmem>>, vector<32x1xf32>
    %1 = arith.index_cast %arg0 : i32 to index
    %c0_1 = arith.constant 0 : index
    %2 = memref.load %arg2[%1, %c0_1] : memref<16x3xf32, #tpu.memory_space<smem>>
    %cst = arith.constant -1.000000e+00 : f32
    %cst_2 = arith.constant 1.000000e+00 : f32
    %3 = vector.broadcast %cst : f32 to vector<32x1xf32>
    %4 = arith.maximumf %3, %0 : vector<32x1xf32>
    %5 = vector.broadcast %cst_2 : f32 to vector<32x1xf32>
    %6 = arith.minimumf %5, %4 : vector<32x1xf32>
    %cst_3 = arith.constant -1.000000e+00 : f32
    %7 = vector.broadcast %cst_3 : f32 to vector<32x1xf32>
    %8 = arith.subf %6, %7 : vector<32x1xf32>
    %9 = vector.broadcast %2 : f32 to vector<32x1xf32>
    %10 = arith.divf %8, %9 : vector<32x1xf32>
    %11 = math.floor %10 : vector<32x1xf32>
    %12 = arith.fptosi %11 : vector<32x1xf32> to vector<32x1xi32>
    %c1_i32 = arith.constant 1 : i32
    %13 = vector.broadcast %c1_i32 : i32 to vector<32x1xi32>
    %14 = arith.muli %12, %13 : vector<32x1xi32>
    %c1_i32_4 = arith.constant 1 : i32
    %15 = vector.broadcast %c1_i32_4 : i32 to vector<32x1xi32>
    %16 = arith.addi %14, %15 : vector<32x1xi32>
    %c0_5 = arith.constant 0 : index
    %c1 = arith.constant 1 : index
    %17 = vector.load %arg3[%c0_5, %c1] : memref<32x3xf32, #tpu.memory_space<vmem>>, vector<32x1xf32>
    %18 = arith.index_cast %arg0 : i32 to index
    %c1_6 = arith.constant 1 : index
    %19 = memref.load %arg2[%18, %c1_6] : memref<16x3xf32, #tpu.memory_space<smem>>
    %cst_7 = arith.constant -1.000000e+00 : f32
    %cst_8 = arith.constant 1.000000e+00 : f32
    %20 = vector.broadcast %cst_7 : f32 to vector<32x1xf32>
    %21 = arith.maximumf %20, %17 : vector<32x1xf32>
    %22 = vector.broadcast %cst_8 : f32 to vector<32x1xf32>
    %23 = arith.minimumf %22, %21 : vector<32x1xf32>
    %cst_9 = arith.constant -1.000000e+00 : f32
    %24 = vector.broadcast %cst_9 : f32 to vector<32x1xf32>
    %25 = arith.subf %23, %24 : vector<32x1xf32>
    %26 = vector.broadcast %19 : f32 to vector<32x1xf32>
    %27 = arith.divf %25, %26 : vector<32x1xf32>
    %28 = math.floor %27 : vector<32x1xf32>
    %29 = arith.fptosi %28 : vector<32x1xf32> to vector<32x1xi32>
    %c-1640531535_i32 = arith.constant -1640531535 : i32
    %30 = vector.broadcast %c-1640531535_i32 : i32 to vector<32x1xi32>
    %31 = arith.muli %29, %30 : vector<32x1xi32>
    %c-1640531535_i32_10 = arith.constant -1640531535 : i32
    %32 = vector.broadcast %c-1640531535_i32_10 : i32 to vector<32x1xi32>
    %33 = arith.addi %31, %32 : vector<32x1xi32>
    %c0_11 = arith.constant 0 : index
    %c2 = arith.constant 2 : index
    %34 = vector.load %arg3[%c0_11, %c2] : memref<32x3xf32, #tpu.memory_space<vmem>>, vector<32x1xf32>
    %35 = arith.index_cast %arg0 : i32 to index
    %c2_12 = arith.constant 2 : index
    %36 = memref.load %arg2[%35, %c2_12] : memref<16x3xf32, #tpu.memory_space<smem>>
    %cst_13 = arith.constant -1.000000e+00 : f32
    %cst_14 = arith.constant 1.000000e+00 : f32
    %37 = vector.broadcast %cst_13 : f32 to vector<32x1xf32>
    %38 = arith.maximumf %37, %34 : vector<32x1xf32>
    %39 = vector.broadcast %cst_14 : f32 to vector<32x1xf32>
    %40 = arith.minimumf %39, %38 : vector<32x1xf32>
    %cst_15 = arith.constant -1.000000e+00 : f32
    %41 = vector.broadcast %cst_15 : f32 to vector<32x1xf32>
    %42 = arith.subf %40, %41 : vector<32x1xf32>
    %43 = vector.broadcast %36 : f32 to vector<32x1xf32>
    %44 = arith.divf %42, %43 : vector<32x1xf32>
    %45 = math.floor %44 : vector<32x1xf32>
    %46 = arith.fptosi %45 : vector<32x1xf32> to vector<32x1xi32>
    %c805459861_i32 = arith.constant 805459861 : i32
    %47 = vector.broadcast %c805459861_i32 : i32 to vector<32x1xi32>
    %48 = arith.muli %46, %47 : vector<32x1xi32>
    %c805459861_i32_16 = arith.constant 805459861 : i32
    %49 = vector.broadcast %c805459861_i32_16 : i32 to vector<32x1xi32>
    %50 = arith.addi %48, %49 : vector<32x1xi32>
    %51 = arith.xori %14, %31 : vector<32x1xi32>
    %52 = arith.xori %51, %48 : vector<32x1xi32>
    %c524287_i32 = arith.constant 524287 : i32
    %53 = vector.broadcast %c524287_i32 : i32 to vector<32x1xi32>
    %54 = arith.andi %52, %53 : vector<32x1xi32>
    %55 = arith.xori %14, %31 : vector<32x1xi32>
    %56 = arith.xori %55, %50 : vector<32x1xi32>
    %c524287_i32_17 = arith.constant 524287 : i32
    %57 = vector.broadcast %c524287_i32_17 : i32 to vector<32x1xi32>
    %58 = arith.andi %56, %57 : vector<32x1xi32>
    %59 = arith.xori %14, %33 : vector<32x1xi32>
    %60 = arith.xori %59, %48 : vector<32x1xi32>
    %c524287_i32_18 = arith.constant 524287 : i32
    %61 = vector.broadcast %c524287_i32_18 : i32 to vector<32x1xi32>
    %62 = arith.andi %60, %61 : vector<32x1xi32>
    %63 = arith.xori %14, %33 : vector<32x1xi32>
    %64 = arith.xori %63, %50 : vector<32x1xi32>
    %c524287_i32_19 = arith.constant 524287 : i32
    %65 = vector.broadcast %c524287_i32_19 : i32 to vector<32x1xi32>
    %66 = arith.andi %64, %65 : vector<32x1xi32>
    %67 = arith.xori %16, %31 : vector<32x1xi32>
    %68 = arith.xori %67, %48 : vector<32x1xi32>
    %c524287_i32_20 = arith.constant 524287 : i32
    %69 = vector.broadcast %c524287_i32_20 : i32 to vector<32x1xi32>
    %70 = arith.andi %68, %69 : vector<32x1xi32>
    %71 = arith.xori %16, %31 : vector<32x1xi32>
    %72 = arith.xori %71, %50 : vector<32x1xi32>
    %c524287_i32_21 = arith.constant 524287 : i32
    %73 = vector.broadcast %c524287_i32_21 : i32 to vector<32x1xi32>
    %74 = arith.andi %72, %73 : vector<32x1xi32>
    %75 = arith.xori %16, %33 : vector<32x1xi32>
    %76 = arith.xori %75, %48 : vector<32x1xi32>
    %c524287_i32_22 = arith.constant 524287 : i32
    %77 = vector.broadcast %c524287_i32_22 : i32 to vector<32x1xi32>
    %78 = arith.andi %76, %77 : vector<32x1xi32>
    %79 = arith.xori %16, %33 : vector<32x1xi32>
    %80 = arith.xori %79, %50 : vector<32x1xi32>
    %c524287_i32_23 = arith.constant 524287 : i32
    %81 = vector.broadcast %c524287_i32_23 : i32 to vector<32x1xi32>
    %82 = arith.andi %80, %81 : vector<32x1xi32>
    %83 = tpu.concatenate %54, %58, %62, %66, %70, %74, %78, %82 in 1 : vector<32x1xi32>, vector<32x1xi32>, vector<32x1xi32>, vector<32x1xi32>, vector<32x1xi32>, vector<32x1xi32>, vector<32x1xi32>, vector<32x1xi32> -> vector<32x8xi32>
    %c0_24 = arith.constant 0 : index
    %c0_25 = arith.constant 0 : index
    %c0_26 = arith.constant 0 : index
    %84 = vector.load %arg4[%c0_24, %c0_25, %c0_26] : memref<1x32x8xi32, #tpu.memory_space<vmem>>, vector<1x32x8xi32>
    %85 = vector.shape_cast %84 : vector<1x32x8xi32> to vector<32x8xi32>
    %86 = vector.shape_cast %83 : vector<32x8xi32> to vector<1x32x8xi32>
    tpu.vector_store %arg4[%c0_24, %c0_25, %c0_26], %86 {strides = array<i32>} : memref<1x32x8xi32, #tpu.memory_space<vmem>>, vector<1x32x8xi32>,
    return
  }
  func.func @transform_0(%arg0: i32, %arg1: i32) -> (i32, i32) {
    %c0_i32 = arith.constant 0 : i32
    %c0_i32_0 = arith.constant 0 : i32
    %c0_i32_1 = arith.constant 0 : i32
    return %c0_i32, %c0_i32_0 : i32, i32
  }
  func.func @transform_1(%arg0: i32, %arg1: i32) -> (i32, i32) {
    %c0_i32 = arith.constant 0 : i32
    %c0_i32_0 = arith.constant 0 : i32
    return %arg1, %c0_i32 : i32, i32
  }
  func.func @transform_2(%arg0: i32, %arg1: i32) -> (i32, i32, i32) {
    %c0_i32 = arith.constant 0 : i32
    %c0_i32_0 = arith.constant 0 : i32
    return %arg0, %arg1, %c0_i32 : i32, i32, i32
  }
}

</mosaic_0001>

<llo_original>
// kernel: tpu_custom_call.1
$region0: #{tpu_custom_call.1}
  #allocation0 [shape = 'u32[]', space=smem, size = 0x4, offset = 0x4, fixed_abs, tag = 'smem constant byte address 0x4 - core index']
  #allocation1 [shape = 'u32[144,128]{1,0:T(1,128)}', space=vmem, size = 0x12000, scoped, tag = 'internal scratch']
  %s0 = inlined_call_operand.vmem [shape: f32[16,3], index: 0, kind: input, shape index: {}]
  %s1 = inlined_call_operand.vmem [shape: f32[32,3], index: 1, kind: input, shape index: {}]
  %s2 = inlined_call_operand.vmem [shape: s32[16,32,8], index: 2, kind: output, shape index: {}]
  %s3 = sld [smem:[#allocation0]]
  $region45: #{tpu_custom_call.1} parent=0
    _
  %s5 = ssub.s32 1, %s3
  %s6 = scalar_select 0, %s5, %s3
  $region1: #{tpu_custom_call.1} parent=0
    #allocation2 [shape = 'u8[8192]{0}', space=smem, size = 0x2000, scoped, tag = 'input window, operand 0, single buffered']
    #allocation3 [shape = 's32[2]{0}', space=sflag, size = 0x8, scoped, tag = 'scoped memory for tpu_custom_call.1']
    %7 = vsyncpa [#allocation3], 0
    loop: start=0, step=1, limit=18
    $region2: #{tpu_custom_call.1} parent=1 // loop_pre_header
      _
    $region3: #{tpu_custom_call.1} parent=1 // loop_header
      %s9 = sphi 0, %s13
      %p10 = scmp.ge.s32.totalorder %s9, 18
      %s16 = sphi 0, %s28
      %s17 = sphi 0, %s24
      %s18 = sphi 0, %s16
      %s19 = sphi 0, %s17
      %s20 = sphi 0, %s18
      %s21 = sphi 0, %s19
      %s29 = sphi 0, %s29
      %s31 = sphi 0, %s29
      %s32 = sphi 0, %s31
      %s46 = sphi 0, %s32
      %s52 = sphi 0, %s54
      %s55 = sphi 0, %s52
      %s56 = sphi 0, %s55
      %s72 = sphi 0, %s56
      %s80 = sphi 0, %s82
      %s83 = sphi 0, %s80
      %s84 = sphi 0, %s83
      %s100 = sphi 0, %s84
    $region4: #{tpu_custom_call.1} parent=1 // loop_header_branch
      %12 = sbr.rel (%p10) target = $region8
    $region5: #{tpu_custom_call.1} parent=1 // loop_body
      %s14 = ssub.s32 %s9, 1
      %s15 = ssub.s32 %s9, 2
      %s22 = sadd.s32 1, %s17
      %p23 = scmp.ge.s32.totalorder %s22, 1
      %s24 = scalar_select %p23, 0, %s22
      %s25 = sadd.s32 1, %s16
      %s26 = scalar_select %p23, %s25, %s16
      %p27 = scmp.ge.s32.totalorder %s26, 16
      %s28 = scalar_select %p27, 0, %s26
      %s30 = sadd.s32 %s29, 1
      %p33 = scmp.eq.s32.totalorder %s9, 15
      %p34 = scmp.ne.s32.totalorder %s29, %s31
      %p35 = scmp.eq.s32.totalorder %s9, 0
      %p36 = por %p34, %p35
      %p37 = scmp.ne.s32.totalorder %s29, %s31
      %p38 = scmp.eq.s32.totalorder %s14, 15
      %p39 = por %p37, %p38
      %p40 = scmp.ne.s32.totalorder %s31, %s32
      %p41 = scmp.eq.s32.totalorder %s14, 0
      %p42 = por %p40, %p41
      %p43 = scmp.ne.s32.totalorder %s31, %s32
      %p44 = scmp.eq.s32.totalorder %s15, 15
      %p45 = por %p43, %p44
      %p47 = scmp.ne.s32.totalorder %s32, %s46
      %p48 = scmp.eq.s32.totalorder %s15, 0
      %p49 = por %p47, %p48
      %s50 = ssub.s32 %s17, %s24
      %p51 = scmp.eq.s32.totalorder %s50, 0
      %s53 = sadd.s32 %s52, 1
      %s54 = scalar_select %p51, %s52, %s53
      %p57 = pneg %p51
      %p58 = scmp.eq.s32.totalorder %s9, 15
      %p59 = por %p57, %p58
      %p60 = scmp.ne.s32.totalorder %s52, %s55
      %p61 = scmp.eq.s32.totalorder %s9, 0
      %p62 = por %p60, %p61
      %p63 = scmp.ne.s32.totalorder %s52, %s55
      %p64 = scmp.eq.s32.totalorder %s14, 15
      %p65 = por %p63, %p64
      %p66 = scmp.ne.s32.totalorder %s55, %s56
      %p67 = scmp.eq.s32.totalorder %s14, 0
      %p68 = por %p66, %p67
      %p69 = scmp.ne.s32.totalorder %s55, %s56
      %p70 = scmp.eq.s32.totalorder %s15, 15
      %p71 = por %p69, %p70
      %p73 = scmp.ne.s32.totalorder %s56, %s72
      %p74 = scmp.eq.s32.totalorder %s15, 0
      %p75 = por %p73, %p74
      %s76 = ssub.s32 %s16, %s28
      %s77 = ssub.s32 %s17, %s24
      %s78 = sor.u32 %s76, %s77
      %p79 = scmp.eq.s32.totalorder %s78, 0
      %s81 = sadd.s32 %s80, 1
      %s82 = scalar_select %p79, %s80, %s81
      %p85 = pneg %p79
      %p86 = scmp.eq.s32.totalorder %s9, 15
      %p87 = por %p85, %p86
      %p88 = scmp.ne.s32.totalorder %s80, %s83
      %p89 = scmp.eq.s32.totalorder %s9, 0
      %p90 = por %p88, %p89
      %p91 = scmp.ne.s32.totalorder %s80, %s83
      %p92 = scmp.eq.s32.totalorder %s14, 15
      %p93 = por %p91, %p92
      %p94 = scmp.ne.s32.totalorder %s83, %s84
      %p95 = scmp.eq.s32.totalorder %s14, 0
      %p96 = por %p94, %p95
      %p97 = scmp.ne.s32.totalorder %s83, %s84
      %p98 = scmp.eq.s32.totalorder %s15, 15
      %p99 = por %p97, %p98
      %p101 = scmp.ne.s32.totalorder %s84, %s100
      %p102 = scmp.eq.s32.totalorder %s15, 0
      %p103 = por %p101, %p102
      %p104 = scmp.le.s32.totalorder 1, %s9
      %p105 = scmp.lt.s32.totalorder %s9, 17
      %p106 = pnand %p104, %p105
      %p107 = pneg %p106
      // Predicated region
      $region9: #{tpu_custom_call.1} parent=5 // pred_check
        _
      $region10: #{tpu_custom_call.1} parent=5 // pred_check_branch
        %109 = sbr.rel (%p106) target = $region12
      $region11: #{tpu_custom_call.1} parent=5 // pred_region
        %s110 = ssub.s32 %s9, 1
        // Predicated region
        $region13: #{tpu_custom_call.1} parent=11 // pred_check
          %p111 = pneg %p42
        $region14: #{tpu_custom_call.1} parent=11 // pred_check_branch
          %113 = sbr.rel (%p111) target = $region16
        $region15: #{tpu_custom_call.1} parent=11 // pred_region
          %s115 = ssub.s32 256, 256
          %116 = vsyncadd [#allocation3], %s115
          %s117 = sshll.u32 %s0, 4
          %s118 = int_to_ptr.vmem [resolvable:$true] %s117
          %123 = dma.vmem_to_smem %s118, 256, [#allocation2], [#allocation3], 128, 128, 8
        $region16: #{tpu_custom_call.1} parent=11 // pred_fallthru
          _
        // Predicated region
        $region17: #{tpu_custom_call.1} parent=11 // pred_check
          %p124 = pneg %p68
        $region18: #{tpu_custom_call.1} parent=11 // pred_check_branch
          %126 = sbr.rel (%p124) target = $region20
        $region19: #{tpu_custom_call.1} parent=11 // pred_region
          %s127 = smul.u32 4, %s19
          %p128 = scmp.lt.s32.totalorder %s127, 3
          %s129 = scalar_select %p128, %s127, 3
          %s130 = smul.addr %s129, 8
          %s131 = scalar_lea.vmem %s1, %s130
          %s132 = smul.u32 4, %s19
        $region20: #{tpu_custom_call.1} parent=11 // pred_fallthru
          _
      $region12: #{tpu_custom_call.1} parent=5 // pred_fallthru
        _
      %p133 = scmp.lt.s32.totalorder %s9, 16
      // Predicated region
      $region21: #{tpu_custom_call.1} parent=5 // pred_check
        %p134 = pneg %p133
      $region22: #{tpu_custom_call.1} parent=5 // pred_check_branch
        %136 = sbr.rel (%p134) target = $region24
      $region23: #{tpu_custom_call.1} parent=5 // pred_region
        _
      $region24: #{tpu_custom_call.1} parent=5 // pred_fallthru
        _
      %p137 = scmp.le.s32.totalorder 1, %s9
      %p138 = scmp.lt.s32.totalorder %s9, 17
      %p139 = pnand %p137, %p138
      %p140 = pneg %p139
      // Predicated region
      $region25: #{tpu_custom_call.1} parent=5 // pred_check
        _
      $region26: #{tpu_custom_call.1} parent=5 // pred_check_branch
        %142 = sbr.rel (%p139) target = $region28
      $region27: #{tpu_custom_call.1} parent=5 // pred_region
        %s143 = ssub.s32 %s9, 1
        // Predicated region
        $region29: #{tpu_custom_call.1} parent=27 // pred_check
          %p144 = pneg %p42
        $region30: #{tpu_custom_call.1} parent=27 // pred_check_branch
          %146 = sbr.rel (%p144) target = $region32
        $region31: #{tpu_custom_call.1} parent=27 // pred_region
          %147 = dma.done [#allocation3], 256
        $region32: #{tpu_custom_call.1} parent=27 // pred_fallthru
          _
        %148 = sfence
        %p149 = pneg %p42
        %p150 = pneg %p39
        %s151 = smul.u32 4, %s19
        %p152 = scmp.lt.s32.totalorder %s151, 3
        %s153 = scalar_select %p152, %s151, 3
        %s154 = smul.addr %s153, 8
        %s155 = scalar_lea.vmem %s1, %s154
        %p156 = pneg %p68
        %p157 = pneg %p65
        %p158 = pneg %p96
        %p159 = pneg %p93
        %s160 = smul.u32 4, %s19
        %p161 = scmp.lt.s32.totalorder %s18, 15
        %s162 = scalar_select %p161, %s18, 15
        %p163 = scmp.lt.s32.totalorder %s160, 3
        %s164 = scalar_select %p163, %s160, 3
        %s165 = smul.addr %s162, 4
        %s166 = sadd.s32 %s164, %s165
        %s167 = smul.addr %s166, 8
        %s168 = scalar_lea.vmem %s2, %s167
        %s169 = smul.u32 4, %s19
        %p170 = scmp.lt.s32.totalorder %s169, 3
        %s171 = scalar_select %p170, %s169, 3
        %s172 = smul.addr %s171, 8
        %s173 = scalar_lea.vmem %s1, %s172
        %s174 = smul.u32 4, %s19
        %s175 = smul.u32 4, %s19
        %p176 = scmp.lt.s32.totalorder %s18, 15
        %s177 = scalar_select %p176, %s18, 15
        %p178 = scmp.lt.s32.totalorder %s175, 3
        %s179 = scalar_select %p178, %s175, 3
        %s180 = smul.addr %s177, 4
        %s181 = sadd.s32 %s179, %s180
        %s182 = smul.addr %s181, 8
        %s183 = scalar_lea.vmem %s2, %s182
        %s184 = smul.u32 4, %s19
        %v185 = vld [vmem:[%s173] sm:$0xff]
        %v186 = vld [vmem:[%s173 + $0x8] sm:$0xff]
        %v187 = vld [vmem:[%s173 + $0x10] sm:$0xff]
        %v188 = vld [vmem:[%s173 + $0x18] sm:$0xff]
        %s189 = smul.u32 %s18, 128
        %s190 = sld [smem:[#allocation2 + %s189]]
        %v191 = vmax.f32 %v185, -1.0
        %v192 = vmax.f32 %v186, -1.0
        %v193 = vmax.f32 %v187, -1.0
        %v194 = vmax.f32 %v188, -1.0
        %v195 = vmin.f32 %v191, 1.0
        %v196 = vmin.f32 %v192, 1.0
        %v197 = vmin.f32 %v193, 1.0
        %v198 = vmin.f32 %v194, 1.0
        %v199 = vsub.f32 %v195, -1.0
        %v200 = vsub.f32 %v196, -1.0
        %v201 = vsub.f32 %v197, -1.0
        %v202 = vsub.f32 %v198, -1.0
        %v203 = vstv %s190
        %v204 = vrcp.pop %v203
        %v205 = vmul.f32 %v199, %v204
        %v206 = vmul.f32 %v200, %v204
        %v207 = vmul.f32 %v201, %v204
        %v208 = vmul.f32 %v202, %v204
        %v209 = vfloor.f32 %v205
        %v210 = vfloor.f32 %v206
        %v211 = vfloor.f32 %v207
        %v212 = vfloor.f32 %v208
        %v213 = vcvt.f32.s32.to.zero.pseudo %v209
        %v214 = vcvt.f32.s32.to.zero.pseudo %v210
        %v215 = vcvt.f32.s32.to.zero.pseudo %v211
        %v216 = vcvt.f32.s32.to.zero.pseudo %v212
        %v217 = vadd.s32 %v213, 1
        %v218 = vadd.s32 %v214, 1
        %v219 = vadd.s32 %v215, 1
        %v220 = vadd.s32 %v216, 1
        %s221 = sadd.s32 %s189, 1
        %s222 = sld [smem:[#allocation2 + %s221]]
        %v223 = vstv %s222
        %v224 = vrcp.pop %v223
        %v225 = vmul.f32 %v199, %v224
        %v226 = vmul.f32 %v200, %v224
        %v227 = vmul.f32 %v201, %v224
        %v228 = vmul.f32 %v202, %v224
        %v229 = vfloor.f32 %v225
        %v230 = vfloor.f32 %v226
        %v231 = vfloor.f32 %v227
        %v232 = vfloor.f32 %v228
        %v233 = vcvt.f32.s32.to.zero.pseudo %v229
        %v234 = vcvt.f32.s32.to.zero.pseudo %v230
        %v235 = vcvt.f32.s32.to.zero.pseudo %v231
        %v236 = vcvt.f32.s32.to.zero.pseudo %v232
        %v237 = vmul.u32 %v233, 2654435761
        %v238 = vmul.u32 %v234, 2654435761
        %v239 = vmul.u32 %v235, 2654435761
        %v240 = vmul.u32 %v236, 2654435761
        %v241 = vadd.s32 %v237, 2654435761
        %v242 = vadd.s32 %v238, 2654435761
        %v243 = vadd.s32 %v239, 2654435761
        %v244 = vadd.s32 %v240, 2654435761
        %s245 = sadd.s32 %s189, 2
        %s246 = sld [smem:[#allocation2 + %s245]]
        %v247 = vstv %s246
        %v248 = vrcp.pop %v247
        %v249 = vmul.f32 %v199, %v248
        %v250 = vmul.f32 %v200, %v248
        %v251 = vmul.f32 %v201, %v248
        %v252 = vmul.f32 %v202, %v248
        %v253 = vfloor.f32 %v249
        %v254 = vfloor.f32 %v250
        %v255 = vfloor.f32 %v251
        %v256 = vfloor.f32 %v252
        %v257 = vcvt.f32.s32.to.zero.pseudo %v253
        %v258 = vcvt.f32.s32.to.zero.pseudo %v254
        %v259 = vcvt.f32.s32.to.zero.pseudo %v255
        %v260 = vcvt.f32.s32.to.zero.pseudo %v256
        %v261 = vmul.u32 %v257, 805459861
        %v262 = vmul.u32 %v258, 805459861
        %v263 = vmul.u32 %v259, 805459861
        %v264 = vmul.u32 %v260, 805459861
        %v265 = vadd.s32 %v261, 805459861
        %v266 = vadd.s32 %v262, 805459861
        %v267 = vadd.s32 %v263, 805459861
        %v268 = vadd.s32 %v264, 805459861
        %269 = vrot.lane.b32.xlu0 %v237, 127
        %v270 = vpop.permute.xlu0 %269
        %271 = vrot.lane.b32.xlu0 %v238, 127
        %v272 = vpop.permute.xlu0 %271
        %273 = vrot.lane.b32.xlu0 %v239, 127
        %v274 = vpop.permute.xlu0 %273
        %275 = vrot.lane.b32.xlu0 %v240, 127
        %v276 = vpop.permute.xlu0 %275
        %v277 = vxor.u32 %v213, %v270
        %v278 = vxor.u32 %v214, %v272
        %v279 = vxor.u32 %v215, %v274
        %v280 = vxor.u32 %v216, %v276
        %281 = vrot.lane.b32.xlu0 %v261, 126
        %v282 = vpop.permute.xlu0 %281
        %283 = vrot.lane.b32.xlu0 %v262, 126
        %v284 = vpop.permute.xlu0 %283
        %285 = vrot.lane.b32.xlu0 %v263, 126
        %v286 = vpop.permute.xlu0 %285
        %287 = vrot.lane.b32.xlu0 %v264, 126
        %v288 = vpop.permute.xlu0 %287
        %v289 = vxor.u32 %v277, %v282
        %v290 = vxor.u32 %v278, %v284
        %v291 = vxor.u32 %v279, %v286
        %v292 = vxor.u32 %v280, %v288
        %v293 = vand.u32 %v289, 524287
        %v294 = vand.u32 %v290, 524287
        %v295 = vand.u32 %v291, 524287
        %v296 = vand.u32 %v292, 524287
        %297 = vrot.lane.b32.xlu0 %v265, 126
        %v298 = vpop.permute.xlu0 %297
        %299 = vrot.lane.b32.xlu0 %v266, 126
        %v300 = vpop.permute.xlu0 %299
        %301 = vrot.lane.b32.xlu0 %v267, 126
        %v302 = vpop.permute.xlu0 %301
        %303 = vrot.lane.b32.xlu0 %v268, 126
        %v304 = vpop.permute.xlu0 %303
        %v305 = vxor.u32 %v277, %v298
        %v306 = vxor.u32 %v278, %v300
        %v307 = vxor.u32 %v279, %v302
        %v308 = vxor.u32 %v280, %v304
        %v309 = vand.u32 %v305, 524287
        %v310 = vand.u32 %v306, 524287
        %v311 = vand.u32 %v307, 524287
        %v312 = vand.u32 %v308, 524287
        %313 = vrot.lane.b32.xlu0 %v241, 127
        %v314 = vpop.permute.xlu0 %313
        %315 = vrot.lane.b32.xlu0 %v242, 127
        %v316 = vpop.permute.xlu0 %315
        %317 = vrot.lane.b32.xlu0 %v243, 127
        %v318 = vpop.permute.xlu0 %317
        %319 = vrot.lane.b32.xlu0 %v244, 127
        %v320 = vpop.permute.xlu0 %319
        %v321 = vxor.u32 %v213, %v314
        %v322 = vxor.u32 %v214, %v316
        %v323 = vxor.u32 %v215, %v318
        %v324 = vxor.u32 %v216, %v320
        %v325 = vxor.u32 %v321, %v282
        %v326 = vxor.u32 %v322, %v284
        %v327 = vxor.u32 %v323, %v286
        %v328 = vxor.u32 %v324, %v288
        %v329 = vand.u32 %v325, 524287
        %v330 = vand.u32 %v326, 524287
        %v331 = vand.u32 %v327, 524287
        %v332 = vand.u32 %v328, 524287
        %v333 = vxor.u32 %v321, %v298
        %v334 = vxor.u32 %v322, %v300
        %v335 = vxor.u32 %v323, %v302
        %v336 = vxor.u32 %v324, %v304
        %v337 = vand.u32 %v333, 524287
        %v338 = vand.u32 %v334, 524287
        %v339 = vand.u32 %v335, 524287
        %v340 = vand.u32 %v336, 524287
        %v341 = vxor.u32 %v217, %v270
        %v342 = vxor.u32 %v218, %v272
        %v343 = vxor.u32 %v219, %v274
        %v344 = vxor.u32 %v220, %v276
        %v345 = vxor.u32 %v341, %v282
        %v346 = vxor.u32 %v342, %v284
        %v347 = vxor.u32 %v343, %v286
        %v348 = vxor.u32 %v344, %v288
        %v349 = vand.u32 %v345, 524287
        %v350 = vand.u32 %v346, 524287
        %v351 = vand.u32 %v347, 524287
        %v352 = vand.u32 %v348, 524287
        %v353 = vxor.u32 %v341, %v298
        %v354 = vxor.u32 %v342, %v300
        %v355 = vxor.u32 %v343, %v302
        %v356 = vxor.u32 %v344, %v304
        %v357 = vand.u32 %v353, 524287
        %v358 = vand.u32 %v354, 524287
        %v359 = vand.u32 %v355, 524287
        %v360 = vand.u32 %v356, 524287
        %v361 = vxor.u32 %v217, %v314
        %v362 = vxor.u32 %v218, %v316
        %v363 = vxor.u32 %v219, %v318
        %v364 = vxor.u32 %v220, %v320
        %v365 = vxor.u32 %v361, %v282
        %v366 = vxor.u32 %v362, %v284
        %v367 = vxor.u32 %v363, %v286
        %v368 = vxor.u32 %v364, %v288
        %v369 = vand.u32 %v365, 524287
        %v370 = vand.u32 %v366, 524287
        %v371 = vand.u32 %v367, 524287
        %v372 = vand.u32 %v368, 524287
        %v373 = vxor.u32 %v361, %v298
        %v374 = vxor.u32 %v362, %v300
        %v375 = vxor.u32 %v363, %v302
        %v376 = vxor.u32 %v364, %v304
        %v377 = vand.u32 %v373, 524287
        %v378 = vand.u32 %v374, 524287
        %v379 = vand.u32 %v375, 524287
        %v380 = vand.u32 %v376, 524287
        %381 = vrot.lane.b32.xlu0 %v309, 1
        %v382 = vpop.permute.xlu0 %381
        %383 = vrot.lane.b32.xlu0 %v310, 1
        %v384 = vpop.permute.xlu0 %383
        %385 = vrot.lane.b32.xlu0 %v311, 1
        %v386 = vpop.permute.xlu0 %385
        %387 = vrot.lane.b32.xlu0 %v312, 1
        %v388 = vpop.permute.xlu0 %387
        %389 = vrot.lane.b32.xlu0 %v329, 2
        %v390 = vpop.permute.xlu0 %389
        %391 = vrot.lane.b32.xlu0 %v330, 2
        %v392 = vpop.permute.xlu0 %391
        %393 = vrot.lane.b32.xlu0 %v331, 2
        %v394 = vpop.permute.xlu0 %393
        %395 = vrot.lane.b32.xlu0 %v332, 2
        %v396 = vpop.permute.xlu0 %395
        %397 = vrot.lane.b32.xlu0 %v337, 3
        %v398 = vpop.permute.xlu0 %397
        %399 = vrot.lane.b32.xlu0 %v338, 3
        %v400 = vpop.permute.xlu0 %399
        %401 = vrot.lane.b32.xlu0 %v339, 3
        %v402 = vpop.permute.xlu0 %401
        %403 = vrot.lane.b32.xlu0 %v340, 3
        %v404 = vpop.permute.xlu0 %403
        %405 = vrot.lane.b32.xlu0 %v349, 4
        %v406 = vpop.permute.xlu0 %405
        %407 = vrot.lane.b32.xlu0 %v350, 4
        %v408 = vpop.permute.xlu0 %407
        %409 = vrot.lane.b32.xlu0 %v351, 4
        %v410 = vpop.permute.xlu0 %409
        %411 = vrot.lane.b32.xlu0 %v352, 4
        %v412 = vpop.permute.xlu0 %411
        %413 = vrot.lane.b32.xlu0 %v357, 5
        %v414 = vpop.permute.xlu0 %413
        %415 = vrot.lane.b32.xlu0 %v358, 5
        %v416 = vpop.permute.xlu0 %415
        %417 = vrot.lane.b32.xlu0 %v359, 5
        %v418 = vpop.permute.xlu0 %417
        %419 = vrot.lane.b32.xlu0 %v360, 5
        %v420 = vpop.permute.xlu0 %419
        %421 = vrot.lane.b32.xlu0 %v369, 6
        %v422 = vpop.permute.xlu0 %421
        %423 = vrot.lane.b32.xlu0 %v370, 6
        %v424 = vpop.permute.xlu0 %423
        %425 = vrot.lane.b32.xlu0 %v371, 6
        %v426 = vpop.permute.xlu0 %425
        %427 = vrot.lane.b32.xlu0 %v372, 6
        %v428 = vpop.permute.xlu0 %427
        %429 = vrot.lane.b32.xlu0 %v377, 7
        %v430 = vpop.permute.xlu0 %429
        %431 = vrot.lane.b32.xlu0 %v378, 7
        %v432 = vpop.permute.xlu0 %431
        %433 = vrot.lane.b32.xlu0 %v379, 7
        %v434 = vpop.permute.xlu0 %433
        %435 = vrot.lane.b32.xlu0 %v380, 7
        %v436 = vpop.permute.xlu0 %435
        %vm437 = vcmask 7168
        %v438 = vsel %vm437, %v293, %v382
        %v439 = vsel %vm437, %v294, %v384
        %v440 = vsel %vm437, %v295, %v386
        %v441 = vsel %vm437, %v296, %v388
        %vm442 = vcmask 15360
        %v443 = vsel %vm442, %v438, %v390
        %v444 = vsel %vm442, %v439, %v392
        %v445 = vsel %vm442, %v440, %v394
        %v446 = vsel %vm442, %v441, %v396
        %vm447 = vcmask 23552
        %v448 = vsel %vm447, %v443, %v398
        %v449 = vsel %vm447, %v444, %v400
        %v450 = vsel %vm447, %v445, %v402
        %v451 = vsel %vm447, %v446, %v404
        %vm452 = vcmask 31744
        %v453 = vsel %vm452, %v448, %v406
        %v454 = vsel %vm452, %v449, %v408
        %v455 = vsel %vm452, %v450, %v410
        %v456 = vsel %vm452, %v451, %v412
        %vm457 = vcmask 39936
        %v458 = vsel %vm457, %v453, %v414
        %v459 = vsel %vm457, %v454, %v416
        %v460 = vsel %vm457, %v455, %v418
        %v461 = vsel %vm457, %v456, %v420
        %vm462 = vcmask 48128
        %v463 = vsel %vm462, %v458, %v422
        %v464 = vsel %vm462, %v459, %v424
        %v465 = vsel %vm462, %v460, %v426
        %v466 = vsel %vm462, %v461, %v428
        %vm467 = vcmask 56320
        %v468 = vsel %vm467, %v463, %v430
        %v469 = vsel %vm467, %v464, %v432
        %v470 = vsel %vm467, %v465, %v434
        %v471 = vsel %vm467, %v466, %v436
        %vm472 = vcmask 64512
        %473 = vst.msk [vmem:[%s183] sm:$0xff] %vm472, %v468
        %474 = vst.msk [vmem:[%s183 + $0x8] sm:$0xff] %vm472, %v469
        %475 = vst.msk [vmem:[%s183 + $0x10] sm:$0xff] %vm472, %v470
        %476 = vst.msk [vmem:[%s183 + $0x18] sm:$0xff] %vm472, %v471
        %s477 = smul.u32 4, %s19
        %p478 = scmp.lt.s32.totalorder %s18, 15
        %s479 = scalar_select %p478, %s18, 15
        %p480 = scmp.lt.s32.totalorder %s477, 3
        %s481 = scalar_select %p480, %s477, 3
        %s482 = smul.addr %s479, 4
        %s483 = sadd.s32 %s481, %s482
        %s484 = smul.addr %s483, 8
        %s485 = scalar_lea.vmem %s2, %s484
        // Predicated region
        $region33: #{tpu_custom_call.1} parent=27 // pred_check
          %p486 = pneg %p93
        $region34: #{tpu_custom_call.1} parent=27 // pred_check_branch
          %488 = sbr.rel (%p486) target = $region36
        $region35: #{tpu_custom_call.1} parent=27 // pred_region
          %s489 = smul.u32 4, %s19
        $region36: #{tpu_custom_call.1} parent=27 // pred_fallthru
          _
      $region28: #{tpu_custom_call.1} parent=5 // pred_fallthru
        _
      %p490 = scmp.le.s32.totalorder 2, %s9
      // Predicated region
      $region37: #{tpu_custom_call.1} parent=5 // pred_check
        %p491 = pneg %p490
      $region38: #{tpu_custom_call.1} parent=5 // pred_check_branch
        %493 = sbr.rel (%p491) target = $region40
      $region39: #{tpu_custom_call.1} parent=5 // pred_region
        %s494 = ssub.s32 %s9, 2
        // Predicated region
        $region41: #{tpu_custom_call.1} parent=39 // pred_check
          %p495 = pneg %p99
        $region42: #{tpu_custom_call.1} parent=39 // pred_check_branch
          %497 = sbr.rel (%p495) target = $region44
        $region43: #{tpu_custom_call.1} parent=39 // pred_region
          %s498 = smul.u32 4, %s21
          %p499 = scmp.lt.s32.totalorder %s20, 15
          %s500 = scalar_select %p499, %s20, 15
          %p501 = scmp.lt.s32.totalorder %s498, 3
          %s502 = scalar_select %p501, %s498, 3
          %s503 = smul.addr %s500, 4
          %s504 = sadd.s32 %s502, %s503
          %s505 = smul.addr %s504, 8
          %s506 = scalar_lea.vmem %s2, %s505
        $region44: #{tpu_custom_call.1} parent=39 // pred_fallthru
          _
      $region40: #{tpu_custom_call.1} parent=5 // pred_fallthru
        _
    $region6: #{tpu_custom_call.1} parent=1 // loop_footer
      %s13 = sadd.s32 1, %s9
    $region7: #{tpu_custom_call.1} parent=1 // loop_footer_branch
      %8 = sbr.rel target = $region3
    $region8: #{tpu_custom_call.1} parent=1 // loop_exit
      _
    %507 = vsyncpa [#allocation3], 1
    %s508 = scalar_lea.sflag [#allocation3], 1
    %509 = vsyncpa %s508, 1

</llo_original>
